<compile_context>
chip_gen: v6e
topology: v6e:2x2x1
jax: 0.10.0
libtpu: 0.0.40
codegen_flags: <defaults>
</compile_context>

<pallas_src>
import functools

import jax
import jax.numpy as jnp
from jax.experimental import pallas as pl
from jax.experimental.pallas import tpu as pltpu


def _rbf_kernel(d_ref, off_ref, o_ref, *, neg_inv_delta):
    # d_ref:   (tN, 1)  tile of distances (f32)
    # off_ref: (1,  F)  full offsets row, VMEM-resident across the grid (f32)
    # o_ref:   (tN, F)  output tile
    d = d_ref[...]                                   # (tN, 1)
    off = off_ref[...]                               # (1, F)
    diff = d - off                                   # broadcast -> (tN, F)
    # Negation folded into the constant; exp rides the EUP slot.
    o_ref[...] = jnp.exp((diff * diff) * neg_inv_delta).astype(o_ref.dtype)


def _vmem_capacity_bytes():
    try:
        return int(pltpu.get_tpu_info().vmem_capacity_bytes)
    except Exception:
        # Conservative fallback: v7x per-TensorCore VMEM.
        return 64 * 1024 * 1024


def gaussian_linear_rbf(distances, offsets, delta, *, tile_n=None,
                        out_dtype=jnp.float32):
    """distances: (N, 1), offsets: (F,), delta: python float -> (N, F)."""
    n, one = distances.shape
    assert one == 1, "distances must have shape (N, 1)"
    f = offsets.shape[0]

    out_bytes = jnp.dtype(out_dtype).itemsize
    # In-VMEM lane padding of a block along the feature axis (HBM stays at f).
    f_vmem = ((f + 127) // 128) * 128

    vmem_cap = _vmem_capacity_bytes()
    # Double-buffered bytes per tiled row:
    #   distances tile (tile_n, 1) pads to 128 lanes -> 512 B/row/buffer
    #   output tile    (tile_n, f) occupies f_vmem lanes in VMEM
    per_row = 2 * (128 * 4 + f_vmem * out_bytes)

    if tile_n is None:
        # Largest multiple-of-8 row tile whose double-buffered footprint fits
        # ~1/3 of this generation's VMEM, capped at 1024 (>=85% of HBM roofline
        # already at 512-1024 rows; bigger buys nothing and wastes VMEM / pad).
        budget = vmem_cap // 3
        tile_n = min(1024, max(8, (budget // per_row) // 8 * 8))
        # Keep enough grid steps to shard across v7x's 2 TCs with a balanced
        # tail (>=8 steps when N allows it).
        target_steps = 8
        while tile_n > 8 and pl.cdiv(n, tile_n) < target_steps:
            tile_n //= 2
    tile_n = max(8, (tile_n // 8) * 8)

    grid_n = pl.cdiv(n, tile_n)
    n_pad = grid_n * tile_n

    d = distances.astype(jnp.float32)
    if n_pad != n:
        d = jnp.pad(d, ((0, n_pad - n), (0, 0)))
    off2d = offsets.astype(jnp.float32).reshape(1, f)

    neg_inv_delta = float(-1.0 / float(delta))
    kernel = functools.partial(_rbf_kernel, neg_inv_delta=neg_inv_delta)

    # VMEM estimate: double-buffered tiles + the (grid-invariant, double-
    # buffered) offsets row, which pads to (8, f_vmem) in VMEM.
    vmem_needed = tile_n * per_row + 2 * 8 * f_vmem * 4
    vmem_limit = int(min(max(vmem_needed * 3 // 2, 16 * 1024 * 1024),
                         int(vmem_cap * 0.45)))

    out = pl.pallas_call(
        kernel,
        out_shape=jax.ShapeDtypeStruct((n_pad, f), out_dtype),
        grid_spec=pltpu.PrefetchScalarGridSpec(
            num_scalar_prefetch=0,
            grid=(grid_n,),
            in_specs=[
                # distances tile: (tile_n, 1); last dim equals full array dim.
                pl.BlockSpec((tile_n, 1), lambda i: (i, 0)),
                # offsets: full row at its true width (last dim == array dim);
                # same block index every step -> DMA'd once, VMEM-resident.
                pl.BlockSpec((1, f), lambda i: (0, 0)),
            ],
            # Output written at true F width -> no lane padding, no post-slice.
            out_specs=pl.BlockSpec((tile_n, f), lambda i: (i, 0)),
        ),
        compiler_params=pltpu.CompilerParams(
            dimension_semantics=("parallel",),
            vmem_limit_bytes=vmem_limit,
        ),
    )(d, off2d)

    # Only a contiguous row-prefix trim remains (and only if N was padded).
    return out if n_pad == n else out[:n]


if __name__ == "__main__":
    # Module parameters (deterministic, per __init__ defaults).
    n_features = 150
    max_distance = 5.0
    min_distance = 0.0
    delta = (max_distance - min_distance) / n_features
    offsets = jnp.linspace(min_distance, max_distance, n_features, dtype=jnp.float32)

    # Small deterministic input: 16 distances in [0, 5).
    key = jax.random.PRNGKey(0)
    n = 16
    distances = jax.random.uniform(
        key, (n, 1), dtype=jnp.float32, minval=min_distance, maxval=max_distance
    )

    out = gaussian_linear_rbf(distances, offsets, delta)
    out = jax.block_until_ready(out)

    # Pure-JAX reference check of the forward semantics.
    ref = jnp.exp(-((distances - offsets[None, :]) ** 2) / delta)
    assert out.shape == (n, n_features)
    assert jnp.allclose(out, ref, atol=1e-5, rtol=1e-5)

    print("KERNEL_OK")
</pallas_src>

<mosaic_0001>
module attributes {stable_mosaic.version = 11 : i64} {
  func.func @_rbf_kernel(%arg0: i32, %arg1: memref<8x1xf32, #tpu.memory_space<vmem>>, %arg2: memref<1x150xf32, #tpu.memory_space<vmem>>, %arg3: memref<8x150xf32, #tpu.memory_space<vmem>>) attributes {dimension_semantics = [#tpu.dimension_semantics<parallel>], iteration_bounds = array<i64: 2>, scalar_prefetch = 0 : i64, scratch_operands = 0 : i64, tpu.core_type = #tpu.core_type<tc>, window_params = [{transform_indices = @transform_0, window_bounds = array<i64: 8, 1>}, {pipeline_mode = #tpu.pipeline_mode<synchronous>, transform_indices = @transform_1, window_bounds = array<i64: 1, 150>}, {transform_indices = @transform_2, window_bounds = array<i64: 8, 150>}]} {
    %c0 = arith.constant 0 : index
    %c0_0 = arith.constant 0 : index
    %0 = vector.load %arg1[%c0, %c0_0] : memref<8x1xf32, #tpu.memory_space<vmem>>, vector<8x1xf32>
    %c0_1 = arith.constant 0 : index
    %c0_2 = arith.constant 0 : index
    %1 = vector.load %arg2[%c0_1, %c0_2] : memref<1x150xf32, #tpu.memory_space<vmem>>, vector<1x150xf32>
    %2 = vector.broadcast %0 : vector<8x1xf32> to vector<8x150xf32>
    %3 = vector.broadcast %1 : vector<1x150xf32> to vector<8x150xf32>
    %4 = arith.subf %2, %3 : vector<8x150xf32>
    %5 = arith.mulf %4, %4 : vector<8x150xf32>
    %cst = arith.constant -3.000000e+01 : f32
    %6 = vector.broadcast %cst : f32 to vector<8x150xf32>
    %7 = arith.mulf %5, %6 : vector<8x150xf32>
    %8 = math.exp %7 : vector<8x150xf32>
    %c0_3 = arith.constant 0 : index
    %c0_4 = arith.constant 0 : index
    %9 = vector.load %arg3[%c0_3, %c0_4] : memref<8x150xf32, #tpu.memory_space<vmem>>, vector<8x150xf32>
    tpu.vector_store %arg3[%c0_3, %c0_4], %8 {strides = array<i32>} : memref<8x150xf32, #tpu.memory_space<vmem>>, vector<8x150xf32>,
    return
  }
  func.func @transform_0(%arg0: i32) -> (i32, i32) {
    %c0_i32 = arith.constant 0 : i32
    %c0_i32_0 = arith.constant 0 : i32
    return %arg0, %c0_i32 : i32, i32
  }
  func.func @transform_1(%arg0: i32) -> (i32, i32) {
    %c0_i32 = arith.constant 0 : i32
    %c0_i32_0 = arith.constant 0 : i32
    %c0_i32_1 = arith.constant 0 : i32
    return %c0_i32, %c0_i32_0 : i32, i32
  }
  func.func @transform_2(%arg0: i32) -> (i32, i32) {
    %c0_i32 = arith.constant 0 : i32
    %c0_i32_0 = arith.constant 0 : i32
    return %arg0, %c0_i32 : i32, i32
  }
}

</mosaic_0001>

<llo_original>
// kernel: tpu_custom_call.1
$region0: #{tpu_custom_call.1}
  #allocation0 [shape = 'u32[]', space=smem, size = 0x4, offset = 0x4, fixed_abs, tag = 'smem constant byte address 0x4 - core index']
  #allocation1 [shape = 'u32[144,128]{1,0:T(1,128)}', space=vmem, size = 0x12000, scoped, tag = 'internal scratch']
  %s0 = inlined_call_operand.vmem [shape: f32[16,1], index: 0, kind: input, shape index: {}]
  %s1 = inlined_call_operand.vmem [shape: f32[1,150], index: 1, kind: input, shape index: {}]
  %s2 = inlined_call_operand.hbm [shape: f32[16,150], index: 2, kind: output, shape index: {}]
  %s3 = sld [smem:[#allocation0]]
  $region41: #{tpu_custom_call.1} parent=0
    _
  %s5 = ssub.s32 1, %s3
  %s6 = scalar_select 0, %s5, %s3
  $region1: #{tpu_custom_call.1} parent=0
    #allocation2 [shape = 'u8[16384]{0}', space=vmem, size = 0x4000, scoped, tag = 'output window, operand 0']
    #allocation3 [shape = 's32[2]{0}', space=sflag, size = 0x8, scoped, tag = 'scoped memory for tpu_custom_call.1']
    %7 = vsyncpa [#allocation3], 0
    %s8 = scalar_lea.sflag [#allocation3], 1
    %9 = vsyncpa %s8, 0
    loop: start=0, step=1, limit=4
    $region2: #{tpu_custom_call.1} parent=1 // loop_pre_header
      _
    $region3: #{tpu_custom_call.1} parent=1 // loop_header
      %s11 = sphi 0, %s15
      %p12 = scmp.ge.s32.totalorder %s11, 4
      %s21 = sphi 0, %s23
      %s24 = sphi 0, %s21
      %s25 = sphi 0, %s24
      %s41 = sphi 0, %s25
      %s45 = sphi 0, %s45
      %s47 = sphi 0, %s45
      %s48 = sphi 0, %s47
      %s62 = sphi 0, %s48
      %s68 = sphi 0, %s70
      %s71 = sphi 0, %s68
      %s72 = sphi 0, %s71
      %s88 = sphi 0, %s72
    $region4: #{tpu_custom_call.1} parent=1 // loop_header_branch
      %14 = sbr.rel (%p12) target = $region8
    $region5: #{tpu_custom_call.1} parent=1 // loop_body
      %s16 = ssub.s32 %s11, 1
      %s17 = ssub.s32 %s11, 2
      %s18 = sadd.s32 %s11, 1
      %s19 = ssub.s32 %s11, %s18
      %p20 = scmp.eq.s32.totalorder %s19, 0
      %s22 = sadd.s32 %s21, 1
      %s23 = scalar_select %p20, %s21, %s22
      %p26 = pneg %p20
      %p27 = scmp.eq.s32.totalorder %s11, 1
      %p28 = por %p26, %p27
      %p29 = scmp.ne.s32.totalorder %s21, %s24
      %p30 = scmp.eq.s32.totalorder %s11, 0
      %p31 = por %p29, %p30
      %p32 = scmp.ne.s32.totalorder %s21, %s24
      %p33 = scmp.eq.s32.totalorder %s16, 1
      %p34 = por %p32, %p33
      %p35 = scmp.ne.s32.totalorder %s24, %s25
      %p36 = scmp.eq.s32.totalorder %s16, 0
      %p37 = por %p35, %p36
      %p38 = scmp.ne.s32.totalorder %s24, %s25
      %p39 = scmp.eq.s32.totalorder %s17, 1
      %p40 = por %p38, %p39
      %p42 = scmp.ne.s32.totalorder %s25, %s41
      %p43 = scmp.eq.s32.totalorder %s17, 0
      %p44 = por %p42, %p43
      %s46 = sadd.s32 %s45, 1
      %p49 = scmp.eq.s32.totalorder %s11, 1
      %p50 = scmp.ne.s32.totalorder %s45, %s47
      %p51 = scmp.eq.s32.totalorder %s11, 0
      %p52 = por %p50, %p51
      %p53 = scmp.ne.s32.totalorder %s45, %s47
      %p54 = scmp.eq.s32.totalorder %s16, 1
      %p55 = por %p53, %p54
      %p56 = scmp.ne.s32.totalorder %s47, %s48
      %p57 = scmp.eq.s32.totalorder %s16, 0
      %p58 = por %p56, %p57
      %p59 = scmp.ne.s32.totalorder %s47, %s48
      %p60 = scmp.eq.s32.totalorder %s17, 1
      %p61 = por %p59, %p60
      %p63 = scmp.ne.s32.totalorder %s48, %s62
      %p64 = scmp.eq.s32.totalorder %s17, 0
      %p65 = por %p63, %p64
      %s66 = ssub.s32 %s11, %s18
      %p67 = scmp.eq.s32.totalorder %s66, 0
      %s69 = sadd.s32 %s68, 1
      %s70 = scalar_select %p67, %s68, %s69
      %p73 = pneg %p67
      %p74 = scmp.eq.s32.totalorder %s11, 1
      %p75 = por %p73, %p74
      %p76 = scmp.ne.s32.totalorder %s68, %s71
      %p77 = scmp.eq.s32.totalorder %s11, 0
      %p78 = por %p76, %p77
      %p79 = scmp.ne.s32.totalorder %s68, %s71
      %p80 = scmp.eq.s32.totalorder %s16, 1
      %p81 = por %p79, %p80
      %p82 = scmp.ne.s32.totalorder %s71, %s72
      %p83 = scmp.eq.s32.totalorder %s16, 0
      %p84 = por %p82, %p83
      %p85 = scmp.ne.s32.totalorder %s71, %s72
      %p86 = scmp.eq.s32.totalorder %s17, 1
      %p87 = por %p85, %p86
      %p89 = scmp.ne.s32.totalorder %s72, %s88
      %p90 = scmp.eq.s32.totalorder %s17, 0
      %p91 = por %p89, %p90
      %p92 = scmp.le.s32.totalorder 1, %s11
      %p93 = scmp.lt.s32.totalorder %s11, 3
      %p94 = pnand %p92, %p93
      %p95 = pneg %p94
      // Predicated region
      $region9: #{tpu_custom_call.1} parent=5 // pred_check
        _
      $region10: #{tpu_custom_call.1} parent=5 // pred_check_branch
        %97 = sbr.rel (%p94) target = $region12
      $region11: #{tpu_custom_call.1} parent=5 // pred_region
        %s98 = ssub.s32 %s11, 1
        // Predicated region
        $region13: #{tpu_custom_call.1} parent=11 // pred_check
          %p99 = pneg %p58
        $region14: #{tpu_custom_call.1} parent=11 // pred_check_branch
          %101 = sbr.rel (%p99) target = $region16
        $region15: #{tpu_custom_call.1} parent=11 // pred_region
          _
        $region16: #{tpu_custom_call.1} parent=11 // pred_fallthru
          _
      $region12: #{tpu_custom_call.1} parent=5 // pred_fallthru
        _
      %p102 = scmp.lt.s32.totalorder %s11, 2
      // Predicated region
      $region17: #{tpu_custom_call.1} parent=5 // pred_check
        %p103 = pneg %p102
      $region18: #{tpu_custom_call.1} parent=5 // pred_check_branch
        %105 = sbr.rel (%p103) target = $region20
      $region19: #{tpu_custom_call.1} parent=5 // pred_region
        // Predicated region
        $region21: #{tpu_custom_call.1} parent=19 // pred_check
          %p106 = pneg %p31
        $region22: #{tpu_custom_call.1} parent=19 // pred_check_branch
          %108 = sbr.rel (%p106) target = $region24
        $region23: #{tpu_custom_call.1} parent=19 // pred_region
          %p109 = scmp.lt.s32.totalorder %s11, 1
          %s110 = scalar_select %p109, %s11, 1
          %s111 = smul.addr %s110, 8
          %s112 = scalar_lea.vmem %s0, %s111
        $region24: #{tpu_custom_call.1} parent=19 // pred_fallthru
          _
      $region20: #{tpu_custom_call.1} parent=5 // pred_fallthru
        _
      %p113 = scmp.le.s32.totalorder 1, %s11
      %p114 = scmp.lt.s32.totalorder %s11, 3
      %p115 = pnand %p113, %p114
      %p116 = pneg %p115
      // Predicated region
      $region25: #{tpu_custom_call.1} parent=5 // pred_check
        _
      $region26: #{tpu_custom_call.1} parent=5 // pred_check_branch
        %118 = sbr.rel (%p115) target = $region28
      $region27: #{tpu_custom_call.1} parent=5 // pred_region
        %s119 = ssub.s32 %s11, 1
        %p120 = scmp.lt.s32.totalorder %s16, 1
        %s121 = scalar_select %p120, %s16, 1
        %s122 = smul.addr %s121, 8
        %s123 = scalar_lea.vmem %s0, %s122
        %p124 = pneg %p37
        %p125 = pneg %p34
        %p126 = pneg %p58
        %p127 = pneg %p55
        %p128 = pneg %p84
        %p129 = pneg %p81
        %s130 = sand.u32 %s71, 1
        %s131 = scalar_lea.sflag [#allocation3], %s130
        %s132 = sand.u32 %s71, 1
        %s133 = smul.addr %s132, 16
        %s134 = scalar_lea.vmem [#allocation2], %s133
        %p135 = scmp.lt.s32.totalorder %s16, 1
        %s136 = scalar_select %p135, %s16, 1
        %s137 = smul.addr %s136, 8
        %s138 = scalar_lea.vmem %s0, %s137
        %v139 = vld [vmem:[%s138] sm:$0xff]
        %v140 = vld [vmem:[%s1] sm:$0x3]
        %142 = vset.pattern.permute.xlu0 0
        %143 = vperm.xlu0 %142, %v139
        %v144 = vpop.permute.xlu0 %143
        %v147 = vlaneseq
        %v148 = vshrl.u32 %v147, 7
        %v149 = vsub.s32 0, %v148
        %v150 = vrot.slane %v140, %v149
        %v151 = vlaneseq
        %v152 = vshrl.u32 %v151, 7
        %v153 = vsub.s32 1, %v152
        %v154 = vrot.slane %v140, %v153
        %v157 = vsub.f32 %v144, %v150
        %v158 = vsub.f32 %v144, %v154
        %v159 = vmul.f32 %v157, %v157
        %v160 = vmul.f32 %v158, %v158
        %v161 = vmul.f32 %v159, -30.0
        %v162 = vmul.f32 %v160, -30.0
        %v163 = vmul.f32 %v161, 1.442695
        %v164 = vpow.pop %v163
        %v165 = vmul.f32 %v162, 1.442695
        %v166 = vpow.pop %v165
        %167 = vst [vmem:[%s134] sm:$0xff] %v164
        %vm168 = vcmask 179200
        %169 = vst.msk [vmem:[%s134 + $0x8] sm:$0xff] %vm168, %v166
        %s170 = sand.u32 %s71, 1
        %s171 = scalar_lea.sflag [#allocation3], %s170
        %s172 = sand.u32 %s71, 1
        %s173 = smul.addr %s172, 16
        %s174 = scalar_lea.vmem [#allocation2], %s173
        // Predicated region
        $region29: #{tpu_custom_call.1} parent=27 // pred_check
          %p175 = pneg %p81
        $region30: #{tpu_custom_call.1} parent=27 // pred_check_branch
          %177 = sbr.rel (%p175) target = $region32
        $region31: #{tpu_custom_call.1} parent=27 // pred_region
          %s179 = ssub.s32 256, 256
          %180 = vsyncadd %s171, %s179
          %s181 = smul.addr %s16, 2
          %s182 = smul.addr %s181, 128
          %s183 = scalar_lea.hbm %s2, %s182
          %s185 = sshll.u32 %s174, 4
          %s186 = int_to_ptr.vmem [resolvable:$true] %s185
          %188 = dma.vmem_to_hbm [thread:$0]  %s186, 256, %s183, %s171
        $region32: #{tpu_custom_call.1} parent=27 // pred_fallthru
          _
      $region28: #{tpu_custom_call.1} parent=5 // pred_fallthru
        _
      %p189 = scmp.le.s32.totalorder 2, %s11
      // Predicated region
      $region33: #{tpu_custom_call.1} parent=5 // pred_check
        %p190 = pneg %p189
      $region34: #{tpu_custom_call.1} parent=5 // pred_check_branch
        %192 = sbr.rel (%p190) target = $region36
      $region35: #{tpu_custom_call.1} parent=5 // pred_region
        %s193 = ssub.s32 %s11, 2
        // Predicated region
        $region37: #{tpu_custom_call.1} parent=35 // pred_check
          %p194 = pneg %p87
        $region38: #{tpu_custom_call.1} parent=35 // pred_check_branch
          %196 = sbr.rel (%p194) target = $region40
        $region39: #{tpu_custom_call.1} parent=35 // pred_region
          %s197 = sand.u32 %s72, 1
          %s198 = scalar_lea.sflag [#allocation3], %s197
          %s199 = sand.u32 %s72, 1
          %s200 = smul.addr %s199, 16
          %s201 = scalar_lea.vmem [#allocation2], %s200
          %202 = dma.done %s198, 256
        $region40: #{tpu_custom_call.1} parent=35 // pred_fallthru
          _
      $region36: #{tpu_custom_call.1} parent=5 // pred_fallthru
        _
    $region6: #{tpu_custom_call.1} parent=1 // loop_footer
      %s15 = sadd.s32 1, %s11
    $region7: #{tpu_custom_call.1} parent=1 // loop_footer_branch
      %10 = sbr.rel target = $region3
    $region8: #{tpu_custom_call.1} parent=1 // loop_exit
      _
    %203 = vsyncpa [#allocation3], 1
    %s204 = scalar_lea.sflag [#allocation3], 1
    %205 = vsyncpa %s204, 1

</llo_original>
